<compile_context>
chip_gen: v7x
topology: tpu7x:2x2x1
jax: 0.10.0
libtpu: 0.0.40
codegen_flags: <defaults>
</compile_context>

<pallas_src>
import jax
import jax.numpy as jnp
from jax.experimental import pallas as pl
from jax.experimental.pallas import tpu as pltpu


def _mlp_kernel(x_ref, w1_ref, b1_ref, w2row_ref, b2_ref, o_ref):
    # Layer 1 (MXU): (TB, D) @ (D, Hp) with f32 accumulation; bias + ReLU on VPU.
    h = jnp.dot(x_ref[...], w1_ref[...], preferred_element_type=jnp.float32)
    h = jnp.maximum(h + b1_ref[...], 0.0)
    # Layer 2 as VPU mul + XLU lane-reduce (avoids an N=1 MXU pass):
    # (TB, Hp) * (1, Hp) -> sum over Hp -> (TB, 1)
    z = jnp.sum(h * w2row_ref[...], axis=-1, keepdims=True) + b2_ref[...]
    # Sigmoid: exp on the EUP, exact divide (keeps 1e-5 accuracy vs reference).
    o_ref[...] = (1.0 / (1.0 + jnp.exp(-z))).astype(o_ref.dtype)


def binary_classifier_forward(x, w1, b1, w2, b2, *, block_b=1024, use_bf16=False):
    """x: (B, D) f32; w1: (D, H); b1: (1, H); w2: (H, 1); b2: (1, 1) -> (B, 1).

    Weights are stored transposed vs. torch (w1: (D,H), w2: (H,1)) so the kernel
    does plain x @ W math. Set use_bf16=True for large, HBM-bound batches.
    """
    B, D = x.shape
    H = w1.shape[1]

    # --- pad hidden dim to a lane multiple (128) with zeros: exact same math,
    # since ReLU(0) * 0 contributes nothing to the output.
    H_pad = max(128, ((H + 127) // 128) * 128)
    if H_pad != H:
        w1 = jnp.pad(w1, ((0, 0), (0, H_pad - H)))
        b1 = jnp.pad(b1, ((0, 0), (0, H_pad - H)))
        w2 = jnp.pad(w2, ((0, H_pad - H), (0, 0)))
    w2_row = w2.reshape(1, H_pad)  # (1, Hp) row for the VPU/XLU reduction

    # --- choose the batch tile: as big as possible while keeping
    #     2 * TB*D*4 (double-buffered x) + TB*Hp*4 (f32 hidden) + resident weights
    # under a conservative ~12 MiB so we never exceed the scoped-VMEM default
    # on any generation (v5e 16 MiB, v6e/v7x 32 MiB scoped).
    bytes_per_row = (2 * D + H_pad) * 4
    vmem_budget = 12 * 1024 * 1024
    max_tb = max(8, (vmem_budget // max(bytes_per_row, 1)) // 8 * 8)
    TB = min(block_b, max_tb, ((B + 7) // 8) * 8)
    TB = max(TB, 8)

    # --- pad batch so the grid tiles evenly (extra rows sliced off afterwards;
    # padded rows are pure zeros and never read back).
    B_pad = ((B + TB - 1) // TB) * TB
    if B_pad != B:
        x = jnp.pad(x, ((0, B_pad - B), (0, 0)))

    if use_bf16:
        # Halves the dominant HBM traffic; MXU accumulates in f32 regardless.
        x = x.astype(jnp.bfloat16)
        w1 = w1.astype(jnp.bfloat16)

    grid = (B_pad // TB,)
    out = pl.pallas_call(
        _mlp_kernel,
        out_shape=jax.ShapeDtypeStruct((B_pad, 1), jnp.float32),
        grid=grid,
        in_specs=[
            pl.BlockSpec((TB, D), lambda i: (i, 0)),        # x: streamed per tile
            pl.BlockSpec((D, H_pad), lambda i: (0, 0)),     # w1: VMEM-resident
            pl.BlockSpec((1, H_pad), lambda i: (0, 0)),     # b1: VMEM-resident
            pl.BlockSpec((1, H_pad), lambda i: (0, 0)),     # w2 row: VMEM-resident
            pl.BlockSpec((1, 1), lambda i: (0, 0)),         # b2: VMEM-resident
        ],
        out_specs=pl.BlockSpec((TB, 1), lambda i: (i, 0)),
        compiler_params=pltpu.CompilerParams(
            dimension_semantics=("parallel",)),  # shards batch tiles across v7x TCs
    )(x, w1, b1, w2_row, b2)
    # TODO(synk): (1, B) lane-dense output layout (avoids vst.msk partial stores)
    # not applied; output is 4 B/row vs >=D*4 B/row of input, so it is noise here.
    return out[:B]


def init_params(key, input_dim, hidden=100):
    """Deterministic init mimicking torch.nn.Linear default (U[-1/sqrt(fan_in), +])."""
    k1, k2, k3, k4 = jax.random.split(key, 4)
    bound1 = 1.0 / jnp.sqrt(input_dim)
    bound2 = 1.0 / jnp.sqrt(hidden)
    w1 = jax.random.uniform(k1, (input_dim, hidden), jnp.float32, -bound1, bound1)
    b1 = jax.random.uniform(k2, (1, hidden), jnp.float32, -bound1, bound1)
    w2 = jax.random.uniform(k3, (hidden, 1), jnp.float32, -bound2, bound2)
    b2 = jax.random.uniform(k4, (1, 1), jnp.float32, -bound2, bound2)
    return w1, b1, w2, b2


if __name__ == "__main__":
    key = jax.random.PRNGKey(0)
    kx, kp = jax.random.split(key)

    batch, input_dim = 8, 32
    x = jax.random.normal(kx, (batch, input_dim), jnp.float32)
    w1, b1, w2, b2 = init_params(kp, input_dim)

    out = binary_classifier_forward(x, w1, b1, w2, b2)
    out = jax.block_until_ready(out)

    # Reference check in plain JAX (same math as the PyTorch module).
    ref = jax.nn.sigmoid(jnp.maximum(x @ w1 + b1, 0.0) @ w2 + b2)
    assert out.shape == (batch, 1)
    assert jnp.allclose(out, ref, atol=1e-5, rtol=1e-5)

    print("KERNEL_OK")
</pallas_src>

<mosaic_0001>
module attributes {stable_mosaic.version = 11 : i64} {
  func.func @_mlp_kernel(%arg0: i32, %arg1: memref<8x32xf32, #tpu.memory_space<vmem>>, %arg2: memref<32x128xf32, #tpu.memory_space<vmem>>, %arg3: memref<1x128xf32, #tpu.memory_space<vmem>>, %arg4: memref<1x128xf32, #tpu.memory_space<vmem>>, %arg5: memref<1x1xf32, #tpu.memory_space<vmem>>, %arg6: memref<8x1xf32, #tpu.memory_space<vmem>>) attributes {dimension_semantics = [#tpu.dimension_semantics<parallel>], iteration_bounds = array<i64: 1>, scalar_prefetch = 0 : i64, scratch_operands = 0 : i64, tpu.core_type = #tpu.core_type<tc>, window_params = [{transform_indices = @transform_0, window_bounds = array<i64: 8, 32>}, {pipeline_mode = #tpu.pipeline_mode<synchronous>, transform_indices = @transform_1, window_bounds = array<i64: 32, 128>}, {pipeline_mode = #tpu.pipeline_mode<synchronous>, transform_indices = @transform_2, window_bounds = array<i64: 1, 128>}, {pipeline_mode = #tpu.pipeline_mode<synchronous>, transform_indices = @transform_3, window_bounds = array<i64: 1, 128>}, {pipeline_mode = #tpu.pipeline_mode<synchronous>, transform_indices = @transform_4, window_bounds = array<i64: 1, 1>}, {transform_indices = @transform_5, window_bounds = array<i64: 8, 1>}]} {
    %c0 = arith.constant 0 : index
    %c0_0 = arith.constant 0 : index
    %0 = vector.load %arg1[%c0, %c0_0] : memref<8x32xf32, #tpu.memory_space<vmem>>, vector<8x32xf32>
    %c0_1 = arith.constant 0 : index
    %c0_2 = arith.constant 0 : index
    %1 = vector.load %arg2[%c0_1, %c0_2] : memref<32x128xf32, #tpu.memory_space<vmem>>, vector<32x128xf32>
    %cst = arith.constant dense<0.000000e+00> : vector<8x128xf32>
    %2 = tpu.matmul %0, %1, %cst {dimension_numbers = #tpu.dot_dimension_numbers<[1], [0], [0], [1], [0, 0, 1, 1], [], []>} : vector<8x32xf32>, vector<32x128xf32>, vector<8x128xf32> -> vector<8x128xf32>
    %c0_3 = arith.constant 0 : index
    %c0_4 = arith.constant 0 : index
    %3 = vector.load %arg3[%c0_3, %c0_4] : memref<1x128xf32, #tpu.memory_space<vmem>>, vector<1x128xf32>
    %4 = vector.broadcast %3 : vector<1x128xf32> to vector<8x128xf32>
    %5 = arith.addf %2, %4 : vector<8x128xf32>
    %cst_5 = arith.constant 0.000000e+00 : f32
    %6 = vector.broadcast %cst_5 : f32 to vector<8x128xf32>
    %7 = arith.maximumf %5, %6 : vector<8x128xf32>
    %c0_6 = arith.constant 0 : index
    %c0_7 = arith.constant 0 : index
    %8 = vector.load %arg4[%c0_6, %c0_7] : memref<1x128xf32, #tpu.memory_space<vmem>>, vector<1x128xf32>
    %9 = vector.broadcast %8 : vector<1x128xf32> to vector<8x128xf32>
    %10 = arith.mulf %7, %9 : vector<8x128xf32>
    %cst_8 = arith.constant dense<0.000000e+00> : vector<8xf32>
    %11 = vector.multi_reduction <add>, %10, %cst_8 [1] : vector<8x128xf32> to vector<8xf32>
    %12 = vector.shape_cast %11 : vector<8xf32> to vector<8x1xf32>
    %c0_9 = arith.constant 0 : index
    %c0_10 = arith.constant 0 : index
    %13 = vector.load %arg5[%c0_9, %c0_10] : memref<1x1xf32, #tpu.memory_space<vmem>>, vector<1x1xf32>
    %14 = vector.broadcast %13 : vector<1x1xf32> to vector<8x1xf32>
    %15 = arith.addf %12, %14 : vector<8x1xf32>
    %cst_11 = arith.constant 0.000000e+00 : f32
    %16 = vector.broadcast %cst_11 : f32 to vector<8x1xf32>
    %17 = arith.subf %16, %15 : vector<8x1xf32>
    %18 = math.exp %17 : vector<8x1xf32>
    %cst_12 = arith.constant 1.000000e+00 : f32
    %19 = vector.broadcast %cst_12 : f32 to vector<8x1xf32>
    %20 = arith.addf %19, %18 : vector<8x1xf32>
    %cst_13 = arith.constant 1.000000e+00 : f32
    %21 = vector.broadcast %cst_13 : f32 to vector<8x1xf32>
    %22 = arith.divf %21, %20 : vector<8x1xf32>
    %c0_14 = arith.constant 0 : index
    %c0_15 = arith.constant 0 : index
    %23 = vector.load %arg6[%c0_14, %c0_15] : memref<8x1xf32, #tpu.memory_space<vmem>>, vector<8x1xf32>
    tpu.vector_store %arg6[%c0_14, %c0_15], %22 {strides = array<i32>} : memref<8x1xf32, #tpu.memory_space<vmem>>, vector<8x1xf32>,
    return
  }
  func.func @transform_0(%arg0: i32) -> (i32, i32) {
    %c0_i32 = arith.constant 0 : i32
    %c0_i32_0 = arith.constant 0 : i32
    return %arg0, %c0_i32 : i32, i32
  }
  func.func @transform_1(%arg0: i32) -> (i32, i32) {
    %c0_i32 = arith.constant 0 : i32
    %c0_i32_0 = arith.constant 0 : i32
    %c0_i32_1 = arith.constant 0 : i32
    return %c0_i32, %c0_i32_0 : i32, i32
  }
  func.func @transform_2(%arg0: i32) -> (i32, i32) {
    %c0_i32 = arith.constant 0 : i32
    %c0_i32_0 = arith.constant 0 : i32
    %c0_i32_1 = arith.constant 0 : i32
    return %c0_i32, %c0_i32_0 : i32, i32
  }
  func.func @transform_3(%arg0: i32) -> (i32, i32) {
    %c0_i32 = arith.constant 0 : i32
    %c0_i32_0 = arith.constant 0 : i32
    %c0_i32_1 = arith.constant 0 : i32
    return %c0_i32, %c0_i32_0 : i32, i32
  }
  func.func @transform_4(%arg0: i32) -> (i32, i32) {
    %c0_i32 = arith.constant 0 : i32
    %c0_i32_0 = arith.constant 0 : i32
    %c0_i32_1 = arith.constant 0 : i32
    return %c0_i32, %c0_i32_0 : i32, i32
  }
  func.func @transform_5(%arg0: i32) -> (i32, i32) {
    %c0_i32 = arith.constant 0 : i32
    %c0_i32_0 = arith.constant 0 : i32
    return %arg0, %c0_i32 : i32, i32
  }
}

</mosaic_0001>

<llo_original>
// kernel: tpu_custom_call.1
$region0: #{tpu_custom_call.1}
  #allocation0 [shape = 'u32[]', space=smem, size = 0x4, offset = 0x4, fixed_abs, tag = 'smem constant byte address 0x4 - core index']
  #allocation1 [shape = 'u32[144,128]{1,0:T(1,128)}', space=vmem, size = 0x12000, scoped, tag = 'internal scratch']
  #allocation2 [shape = 'f32[1,1]{1,0:T(1,128)S(1)}', space=vmem, size = 0x200, scoped, tag = 'scoped memory for tpu_custom_call.1']
  %s0 = inlined_call_operand.hbm [shape: f32[8,32], index: 0, kind: input, shape index: {}]
  %s1 = inlined_call_operand.hbm [shape: f32[32,128], index: 1, kind: input, shape index: {}]
  %s2 = inlined_call_operand.vmem [shape: f32[1,128], index: 2, kind: input, shape index: {}]
  %s3 = inlined_call_operand.vmem [shape: f32[1,128], index: 3, kind: input, shape index: {}]
  %s4 = inlined_call_operand.<no memory space> [shape: f32[1,1], index: 4, kind: input, shape index: {}]
  %s5 = inlined_call_operand.vmem [shape: f32[8,1], index: 5, kind: output, shape index: {}]
  %s6 = sld [smem:[#allocation0]]
  $region38: #{tpu_custom_call.1} parent=0
    _
  %s8 = ssub.s32 1, %s6
  %s9 = scalar_select 0, %s8, %s6
  %v10 = vstv %s4
  %11 = vst [vmem:[#allocation2] sm:$0x1] %v10
  $region1: #{tpu_custom_call.1} parent=0
    #allocation3 [shape = 'u8[4096]{0}', space=vmem, size = 0x1000, scoped, tag = 'input window, operand 0, single buffered']
    #allocation4 [shape = 's32[1]{0}', space=sflag, size = 0x4, scoped, tag = 'scoped memory for tpu_custom_call.1']
    #allocation5 [shape = 'u8[16384]{0}', space=vmem, size = 0x4000, scoped, tag = 'input window, operand 1, single buffered']
    #allocation6 [shape = 's32[1]{0}', space=sflag, size = 0x4, scoped, tag = 'scoped memory for tpu_custom_call.1']
    %12 = vsyncpa [#allocation4], 0
    %13 = vsyncpa [#allocation6], 0
    // Predicated region
    $region2: #{tpu_custom_call.1} parent=1 // pred_check
      _
    $region3: #{tpu_custom_call.1} parent=1 // pred_check_branch
      %15 = sbr.rel (0) target = $region5
    $region4: #{tpu_custom_call.1} parent=1 // pred_region
      %s17 = ssub.s32 128, 128
      %18 = vsyncadd [#allocation4], %s17
      %s20 = sshll.u32 [#allocation3], 4
      %s21 = int_to_ptr.vmem [resolvable:$true] %s20
      %23 = dma.hbm_to_vmem [thread:$0]  %s0, 128, %s21, [#allocation4]
    $region5: #{tpu_custom_call.1} parent=1 // pred_fallthru
      _
    // Predicated region
    $region6: #{tpu_custom_call.1} parent=1 // pred_check
      _
    $region7: #{tpu_custom_call.1} parent=1 // pred_check_branch
      %25 = sbr.rel (0) target = $region9
    $region8: #{tpu_custom_call.1} parent=1 // pred_region
      %s27 = ssub.s32 512, 512
      %28 = vsyncadd [#allocation6], %s27
      %s29 = sshll.u32 [#allocation5], 4
      %s30 = int_to_ptr.vmem [resolvable:$true] %s29
      %35 = dma.hbm_to_vmem [thread:$0]  %s1, 512, %s30, [#allocation6], 128, 128, 8
    $region9: #{tpu_custom_call.1} parent=1 // pred_fallthru
      _
    // Predicated region
    $region10: #{tpu_custom_call.1} parent=1 // pred_check
      _
    $region11: #{tpu_custom_call.1} parent=1 // pred_check_branch
      %37 = sbr.rel (0) target = $region13
    $region12: #{tpu_custom_call.1} parent=1 // pred_region
      _
    $region13: #{tpu_custom_call.1} parent=1 // pred_fallthru
      _
    // Predicated region
    $region14: #{tpu_custom_call.1} parent=1 // pred_check
      _
    $region15: #{tpu_custom_call.1} parent=1 // pred_check_branch
      %39 = sbr.rel (0) target = $region17
    $region16: #{tpu_custom_call.1} parent=1 // pred_region
      _
    $region17: #{tpu_custom_call.1} parent=1 // pred_fallthru
      _
    // Predicated region
    $region18: #{tpu_custom_call.1} parent=1 // pred_check
      _
    $region19: #{tpu_custom_call.1} parent=1 // pred_check_branch
      %41 = sbr.rel (0) target = $region21
    $region20: #{tpu_custom_call.1} parent=1 // pred_region
      _
    $region21: #{tpu_custom_call.1} parent=1 // pred_fallthru
      _
    // Predicated region
    $region22: #{tpu_custom_call.1} parent=1 // pred_check
      _
    $region23: #{tpu_custom_call.1} parent=1 // pred_check_branch
      %43 = sbr.rel (0) target = $region25
    $region24: #{tpu_custom_call.1} parent=1 // pred_region
      %44 = dma.done [#allocation4], 128
    $region25: #{tpu_custom_call.1} parent=1 // pred_fallthru
      _
    // Predicated region
    $region26: #{tpu_custom_call.1} parent=1 // pred_check
      _
    $region27: #{tpu_custom_call.1} parent=1 // pred_check_branch
      %46 = sbr.rel (0) target = $region29
    $region28: #{tpu_custom_call.1} parent=1 // pred_region
      %47 = dma.done [#allocation6], 512
    $region29: #{tpu_custom_call.1} parent=1 // pred_fallthru
      _
    %v48 = vld [vmem:[#allocation3] sm:$0xff]
    %v49 = vld [vmem:[#allocation5] sm:$0xff]
    %v50 = vld [vmem:[#allocation5 + $0x8] sm:$0xff]
    %v51 = vld [vmem:[#allocation5 + $0x10] sm:$0xff]
    %v52 = vld [vmem:[#allocation5 + $0x18] sm:$0xff]
    %v53 = vld [vmem:[%s2] sm:$0x1]
    %v55 = vlaneseq
    %v56 = vshrl.u32 %v55, 7
    %v57 = vsub.s32 0, %v56
    %v58 = vrot.slane %v53, %v57
    %vm60 = vcmask 261120
    %v62 = vsel %vm60, %v48, 0
    %64 = vmatprep.subr.mxu0 0.0
    %65 = vmatpush1.msra.mxu0 %v49
    %66 = vmatprep.subr.mxu0 0.0
    %67 = vmatpush1.msra.mxu0 %v50
    %68 = vmatprep.subr.mxu0 0.0
    %69 = vmatpush1.msra.mxu0 %v51
    %70 = vmatprep.subr.mxu0 0.0
    %71 = vmatpush1.msra.mxu0 %v52
    %72 = vmatprep.subr.mxu0 0.0
    %73 = vmatpush1.msra.mxu0 0.0
    %74 = vmatprep.subr.mxu0 0.0
    %75 = vmatpush1.msra.mxu0 0.0
    %76 = vmatprep.subr.mxu0 0.0
    %77 = vmatpush1.msra.mxu0 0.0
    %78 = vmatprep.subr.mxu0 0.0
    %79 = vmatpush1.msra.mxu0 0.0
    %80 = vmatprep.subr.mxu0 0.0
    %81 = vmatpush1.msra.mxu0 0.0
    %82 = vmatprep.subr.mxu0 0.0
    %83 = vmatpush1.msra.mxu0 0.0
    %84 = vmatprep.subr.mxu0 0.0
    %85 = vmatpush1.msra.mxu0 0.0
    %86 = vmatprep.subr.mxu0 0.0
    %87 = vmatpush1.msra.mxu0 0.0
    %88 = vmatprep.subr.mxu0 0.0
    %89 = vmatpush1.msra.mxu0 0.0
    %90 = vmatprep.subr.mxu0 0.0
    %91 = vmatpush1.msra.mxu0 0.0
    %92 = vmatprep.subr.mxu0 0.0
    %93 = vmatpush1.msra.mxu0 0.0
    %94 = vmatprep.subr.mxu0 0.0
    %95 = vmatpush1.msra.mxu0 0.0
    %96 = vmatprep.subr.mxu0 0.0
    %97 = vmatpush1.msra.mxu0 0.0
    %98 = vmatprep.subr.mxu0 0.0
    %99 = vmatpush1.msra.mxu0 0.0
    %100 = vmatprep.subr.mxu0 0.0
    %101 = vmatpush1.msra.mxu0 0.0
    %102 = vmatprep.subr.mxu0 0.0
    %103 = vmatpush1.msra.mxu0 0.0
    %104 = vmatprep.subr.mxu0 0.0
    %105 = vmatpush1.msra.mxu0 0.0
    %106 = vmatprep.subr.mxu0 0.0
    %107 = vmatpush1.msra.mxu0 0.0
    %108 = vmatprep.subr.mxu0 0.0
    %109 = vmatpush1.msra.mxu0 0.0
    %110 = vmatprep.subr.mxu0 0.0
    %111 = vmatpush1.msra.mxu0 0.0
    %112 = vmatprep.subr.mxu0 0.0
    %113 = vmatpush1.msra.mxu0 0.0
    %114 = vmatprep.subr.mxu0 0.0
    %115 = vmatpush1.msra.mxu0 0.0
    %116 = vmatprep.subr.mxu0 0.0
    %117 = vmatpush1.msra.mxu0 0.0
    %118 = vmatprep.subr.mxu0 0.0
    %119 = vmatpush1.msra.mxu0 0.0
    %120 = vmatprep.subr.mxu0 0.0
    %121 = vmatpush1.msra.mxu0 0.0
    %122 = vmatprep.subr.mxu0 0.0
    %123 = vmatpush1.msra.mxu0 0.0
    %124 = vmatprep.subr.mxu0 0.0
    %125 = vmatpush1.msra.mxu0 0.0
    %126 = vmatprep.subr.mxu0 0.0
    %127 = vmatpush1.msra.mxu0 0.0
    %128 = vmatprep.mubr.f32.mxu0 0.0
    %129 = vmatmul.mubr.f32.gmra.mrb[0].mxu0 %v62
    %v130 = vpop.f32.mrb[0].mxu0
    %v131 = vadd.f32 %v58, %v130
    %v132 = vpop.f32.mrb[0].mxu0
    %133 = vdwg.mxu0
    %v134 = vmax.f32 %v131, 0.0
    %v135 = vld [vmem:[%s3] sm:$0x1]
    %v137 = vlaneseq
    %v138 = vshrl.u32 %v137, 7
    %v139 = vsub.s32 0, %v138
    %v140 = vrot.slane %v135, %v139
    %v142 = vmul.f32 %v134, %v140
    %143 = vadd.xlane.f32.xlu0 %v142
    %v144 = vpop.xlane.xlu0 %143
    %v145 = vld [vmem:[#allocation2] sm:$0x1]
    %v147 = vlaneseq
    %v148 = vshrl.u32 %v147, 7
    %v149 = vsub.s32 0, %v148
    %v150 = vrot.slane %v145, %v149
    %v152 = vadd.f32 %v144, %v150
    %v153 = vsub.f32 0.0, %v152
    %v154 = vmul.f32 %v153, 1.442695
    %v155 = vpow.pop %v154
    %v156 = vadd.f32 %v155, 1.0
    %v157 = vrcp.pop %v156
    %v158 = vmul.f32 1.0, %v157
    %vm159 = vcmask 7168
    %160 = vst.msk [vmem:[%s5] sm:$0xff] %vm159, %v158
    // Predicated region
    $region30: #{tpu_custom_call.1} parent=1 // pred_check
      _
    $region31: #{tpu_custom_call.1} parent=1 // pred_check_branch
      %162 = sbr.rel (0) target = $region33
    $region32: #{tpu_custom_call.1} parent=1 // pred_region
      _
    $region33: #{tpu_custom_call.1} parent=1 // pred_fallthru
      _
    // Predicated region
    $region34: #{tpu_custom_call.1} parent=1 // pred_check
      _
    $region35: #{tpu_custom_call.1} parent=1 // pred_check_branch
      %164 = sbr.rel (0) target = $region37
    $region36: #{tpu_custom_call.1} parent=1 // pred_region
      _
    $region37: #{tpu_custom_call.1} parent=1 // pred_fallthru
      _
    %165 = vsyncpa [#allocation4], 1
    %166 = vsyncpa [#allocation6], 1

</llo_original>
